<compile_context>
chip_gen: v5e
topology: v5e:2x2
jax: 0.10.0
libtpu: 0.0.40
codegen_flags: <defaults>
</compile_context>

<pallas_src>
import jax
import jax.numpy as jnp
from jax.experimental import pallas as pl
from jax.experimental.pallas import tpu as pltpu


def _relu_transpose_kernel(x_ref, o_ref):
    # ReLU runs on the VPU (VALU slot), the tile transpose on the XLU
    # (vector-extended slot) -> they co-issue; the kernel is HBM-bound anyway,
    # so keep the body lean (no zeros_like materialization).
    o_ref[...] = jnp.transpose(jnp.maximum(x_ref[...], 0))


def _pick_tile(dim: int, target: int) -> int:
    # Either the full dimension (exempt from the (8,128) block-alignment rule,
    # covers small / oddly-sized inputs) or a multiple-of-128 tile (lane-dense
    # output stores, aligned input sublanes, ragged edges handled by Pallas
    # block padding + masked stores).
    return dim if dim <= target else target


def relu_transpose(x: jax.Array, *, tm: int = 512, tn: int = 512) -> jax.Array:
    """forward(x) = torch.t(relu(x)) for 2-D x, as a tiled Pallas TPU kernel."""
    assert x.ndim == 2, "torch.t semantics: input must be 2-D"
    M, N = x.shape
    tm = _pick_tile(M, tm)   # becomes output tile's LAST (lane) dim -> keep 128-aligned
    tn = _pick_tile(N, tn)   # input lane dim / output sublane dim

    grid = (pl.cdiv(M, tm), pl.cdiv(N, tn))
    return pl.pallas_call(
        _relu_transpose_kernel,
        out_shape=jax.ShapeDtypeStruct((N, M), x.dtype),
        grid_spec=pltpu.PrefetchScalarGridSpec(
            num_scalar_prefetch=0,
            grid=grid,
            # Input tile (tm, tn) at block (i, j) ...
            in_specs=[pl.BlockSpec((tm, tn), lambda i, j: (i, j))],
            # ... lands as output tile (tn, tm) at swapped block (j, i).
            out_specs=pl.BlockSpec((tn, tm), lambda i, j: (j, i)),
        ),
        compiler_params=pltpu.CompilerParams(
            # Every (i, j) writes a distinct output tile: no reduction axis,
            # both axes shardable across TensorCores (v7x megacore); harmless
            # on single-TC v5e/v6e.
            dimension_semantics=("parallel", "parallel"),
        ),
    )(x)


def _reference(x):
    return jnp.maximum(x, 0).T


if __name__ == "__main__":
    key = jax.random.PRNGKey(0)
    k1, k2 = jax.random.split(key)

    # Multi-tile case: 256 x 384 with 128x128 tiles -> grid (2, 3),
    # double-buffered DMA and lane-dense (128-wide) output stores per tile.
    x_big = jax.random.normal(k1, (256, 384), dtype=jnp.float32)
    out_big = jax.block_until_ready(relu_transpose(x_big, tm=128, tn=128))
    assert out_big.shape == (384, 256), f"bad shape {out_big.shape}"
    assert jnp.allclose(out_big, _reference(x_big)), "mismatch (tiled case)"

    # Small / unaligned case: full-dim blocks (exempt from (8,128) alignment),
    # matching the original tiny-matrix behavior.
    x_small = jax.random.normal(k2, (8, 32), dtype=jnp.float32)
    out_small = jax.block_until_ready(relu_transpose(x_small))
    assert out_small.shape == (32, 8), f"bad shape {out_small.shape}"
    assert jnp.allclose(out_small, _reference(x_small)), "mismatch (small case)"

    print("KERNEL_OK")
</pallas_src>

<mosaic_0001>
module attributes {stable_mosaic.version = 11 : i64} {
  func.func @_relu_transpose_kernel(%arg0: i32, %arg1: i32, %arg2: memref<128x128xf32, #tpu.memory_space<vmem>>, %arg3: memref<128x128xf32, #tpu.memory_space<vmem>>) attributes {dimension_semantics = [#tpu.dimension_semantics<parallel>, #tpu.dimension_semantics<parallel>], iteration_bounds = array<i64: 2, 3>, scalar_prefetch = 0 : i64, scratch_operands = 0 : i64, tpu.core_type = #tpu.core_type<tc>, window_params = [{transform_indices = @transform_0, window_bounds = array<i64: 128, 128>}, {transform_indices = @transform_1, window_bounds = array<i64: 128, 128>}]} {
    %c0 = arith.constant 0 : index
    %c0_0 = arith.constant 0 : index
    %0 = vector.load %arg2[%c0, %c0_0] : memref<128x128xf32, #tpu.memory_space<vmem>>, vector<128x128xf32>
    %cst = arith.constant 0.000000e+00 : f32
    %1 = vector.broadcast %cst : f32 to vector<128x128xf32>
    %2 = arith.maximumf %0, %1 : vector<128x128xf32>
    %3 = tpu.transpose %2, [1, 0] : vector<128x128xf32> -> vector<128x128xf32>
    %c0_1 = arith.constant 0 : index
    %c0_2 = arith.constant 0 : index
    %4 = vector.load %arg3[%c0_1, %c0_2] : memref<128x128xf32, #tpu.memory_space<vmem>>, vector<128x128xf32>
    tpu.vector_store %arg3[%c0_1, %c0_2], %3 {strides = array<i32>} : memref<128x128xf32, #tpu.memory_space<vmem>>, vector<128x128xf32>,
    return
  }
  func.func @transform_0(%arg0: i32, %arg1: i32) -> (i32, i32) {
    %c0_i32 = arith.constant 0 : i32
    return %arg0, %arg1 : i32, i32
  }
  func.func @transform_1(%arg0: i32, %arg1: i32) -> (i32, i32) {
    %c0_i32 = arith.constant 0 : i32
    return %arg1, %arg0 : i32, i32
  }
}

</mosaic_0001>

<llo_original>
// kernel: tpu_custom_call.1
$region0: #{tpu_custom_call.1}
  #allocation0 [shape = 'u32[]', space=smem, size = 0x4, offset = 0x4, fixed_abs, tag = 'smem constant byte address 0x4 - core index']
  #allocation1 [shape = 'u32[72,128]{1,0:T(1,128)}', space=vmem, size = 0x9000, scoped, tag = 'internal scratch']
  %s0 = inlined_call_operand.hbm [shape: f32[256,384], index: 0, kind: input, shape index: {}]
  %s1 = inlined_call_operand.hbm [shape: f32[384,256], index: 1, kind: output, shape index: {}]
  %s2 = sld [smem:[#allocation0]]
  $region41: #{tpu_custom_call.1} parent=0
    _
  %s4 = ssub.s32 1, %s2
  %s5 = scalar_select 0, %s4, %s2
  $region1: #{tpu_custom_call.1} parent=0
    #allocation2 [shape = 'u8[131072]{0}', space=vmem, size = 0x20000, scoped, tag = 'input window, operand 0']
    #allocation3 [shape = 's32[2]{0}', space=sflag, size = 0x8, scoped, tag = 'scoped memory for tpu_custom_call.1']
    #allocation4 [shape = 's32[2]{0}', space=sflag, size = 0x8, scoped, tag = 'scoped memory for tpu_custom_call.1']
    #allocation5 [shape = 'u8[131072]{0}', space=vmem, size = 0x20000, scoped, tag = 'output window, operand 0']
    %6 = vsyncpa [#allocation3], 0
    %s7 = scalar_lea.sflag [#allocation3], 1
    %8 = vsyncpa %s7, 0
    %9 = vsyncpa [#allocation4], 0
    %s10 = scalar_lea.sflag [#allocation4], 1
    %11 = vsyncpa %s10, 0
    loop: start=0, step=1, limit=8
    $region2: #{tpu_custom_call.1} parent=1 // loop_pre_header
      _
    $region3: #{tpu_custom_call.1} parent=1 // loop_header
      %s13 = sphi 0, %s17
      %p14 = scmp.ge.s32.totalorder %s13, 8
      %s20 = sphi 0, %s32
      %s21 = sphi 0, %s28
      %s22 = sphi 0, %s20
      %s23 = sphi 0, %s21
      %s24 = sphi 0, %s22
      %s25 = sphi 0, %s23
      %s37 = sphi 0, %s39
      %s40 = sphi 0, %s37
      %s41 = sphi 0, %s40
      %s57 = sphi 0, %s41
      %s65 = sphi 0, %s67
      %s68 = sphi 0, %s65
      %s69 = sphi 0, %s68
      %s85 = sphi 0, %s69
    $region4: #{tpu_custom_call.1} parent=1 // loop_header_branch
      %16 = sbr.rel (%p14) target = $region8
    $region5: #{tpu_custom_call.1} parent=1 // loop_body
      %s18 = ssub.s32 %s13, 1
      %s19 = ssub.s32 %s13, 2
      %s26 = sadd.s32 1, %s21
      %p27 = scmp.ge.s32.totalorder %s26, 3
      %s28 = scalar_select %p27, 0, %s26
      %s29 = sadd.s32 1, %s20
      %s30 = scalar_select %p27, %s29, %s20
      %p31 = scmp.ge.s32.totalorder %s30, 2
      %s32 = scalar_select %p31, 0, %s30
      %s33 = ssub.s32 %s20, %s32
      %s34 = ssub.s32 %s21, %s28
      %s35 = sor.u32 %s33, %s34
      %p36 = scmp.eq.s32.totalorder %s35, 0
      %s38 = sadd.s32 %s37, 1
      %s39 = scalar_select %p36, %s37, %s38
      %p42 = pneg %p36
      %p43 = scmp.eq.s32.totalorder %s13, 5
      %p44 = por %p42, %p43
      %p45 = scmp.ne.s32.totalorder %s37, %s40
      %p46 = scmp.eq.s32.totalorder %s13, 0
      %p47 = por %p45, %p46
      %p48 = scmp.ne.s32.totalorder %s37, %s40
      %p49 = scmp.eq.s32.totalorder %s18, 5
      %p50 = por %p48, %p49
      %p51 = scmp.ne.s32.totalorder %s40, %s41
      %p52 = scmp.eq.s32.totalorder %s18, 0
      %p53 = por %p51, %p52
      %p54 = scmp.ne.s32.totalorder %s40, %s41
      %p55 = scmp.eq.s32.totalorder %s19, 5
      %p56 = por %p54, %p55
      %p58 = scmp.ne.s32.totalorder %s41, %s57
      %p59 = scmp.eq.s32.totalorder %s19, 0
      %p60 = por %p58, %p59
      %s61 = ssub.s32 %s21, %s28
      %s62 = ssub.s32 %s20, %s32
      %s63 = sor.u32 %s61, %s62
      %p64 = scmp.eq.s32.totalorder %s63, 0
      %s66 = sadd.s32 %s65, 1
      %s67 = scalar_select %p64, %s65, %s66
      %p70 = pneg %p64
      %p71 = scmp.eq.s32.totalorder %s13, 5
      %p72 = por %p70, %p71
      %p73 = scmp.ne.s32.totalorder %s65, %s68
      %p74 = scmp.eq.s32.totalorder %s13, 0
      %p75 = por %p73, %p74
      %p76 = scmp.ne.s32.totalorder %s65, %s68
      %p77 = scmp.eq.s32.totalorder %s18, 5
      %p78 = por %p76, %p77
      %p79 = scmp.ne.s32.totalorder %s68, %s69
      %p80 = scmp.eq.s32.totalorder %s18, 0
      %p81 = por %p79, %p80
      %p82 = scmp.ne.s32.totalorder %s68, %s69
      %p83 = scmp.eq.s32.totalorder %s19, 5
      %p84 = por %p82, %p83
      %p86 = scmp.ne.s32.totalorder %s69, %s85
      %p87 = scmp.eq.s32.totalorder %s19, 0
      %p88 = por %p86, %p87
      %p89 = scmp.le.s32.totalorder 1, %s13
      %p90 = scmp.lt.s32.totalorder %s13, 7
      %p91 = pnand %p89, %p90
      %p92 = pneg %p91
      // Predicated region
      $region9: #{tpu_custom_call.1} parent=5 // pred_check
        _
      $region10: #{tpu_custom_call.1} parent=5 // pred_check_branch
        %94 = sbr.rel (%p91) target = $region12
      $region11: #{tpu_custom_call.1} parent=5 // pred_region
        %s95 = ssub.s32 %s13, 1
      $region12: #{tpu_custom_call.1} parent=5 // pred_fallthru
        _
      %p96 = scmp.lt.s32.totalorder %s13, 6
      // Predicated region
      $region13: #{tpu_custom_call.1} parent=5 // pred_check
        %p97 = pneg %p96
      $region14: #{tpu_custom_call.1} parent=5 // pred_check_branch
        %99 = sbr.rel (%p97) target = $region16
      $region15: #{tpu_custom_call.1} parent=5 // pred_region
        // Predicated region
        $region17: #{tpu_custom_call.1} parent=15 // pred_check
          %p100 = pneg %p47
        $region18: #{tpu_custom_call.1} parent=15 // pred_check_branch
          %102 = sbr.rel (%p100) target = $region20
        $region19: #{tpu_custom_call.1} parent=15 // pred_region
          %s103 = sand.u32 %s37, 1
          %s104 = scalar_lea.sflag [#allocation3], %s103
          %s105 = sand.u32 %s37, 1
          %s106 = smul.addr %s105, 128
          %s107 = scalar_lea.vmem [#allocation2], %s106
          %s108 = smul.u32 16, %s20
          %110 = vsyncadd %s104, 0
          %s111 = smul.addr %s108, 3
          %s112 = sadd.s32 %s21, %s111
          %s113 = smul.addr %s112, 8
          %s114 = scalar_lea.hbm %s0, %s113
          %s115 = sshll.u32 %s114, 4
          %s116 = int_to_ptr.hbm [resolvable:$true] %s115
          %s117 = sshll.u32 %s107, 4
          %s118 = int_to_ptr.vmem [resolvable:$true] %s117
          %123 = dma.hbm_to_vmem [thread:$0]  %s116, 2048, %s118, %s104, 384, 128, 8
        $region20: #{tpu_custom_call.1} parent=15 // pred_fallthru
          _
      $region16: #{tpu_custom_call.1} parent=5 // pred_fallthru
        _
      %p124 = scmp.le.s32.totalorder 1, %s13
      %p125 = scmp.lt.s32.totalorder %s13, 7
      %p126 = pnand %p124, %p125
      %p127 = pneg %p126
      // Predicated region
      $region21: #{tpu_custom_call.1} parent=5 // pred_check
        _
      $region22: #{tpu_custom_call.1} parent=5 // pred_check_branch
        %129 = sbr.rel (%p126) target = $region24
      $region23: #{tpu_custom_call.1} parent=5 // pred_region
        %s130 = ssub.s32 %s13, 1
        %s131 = sand.u32 %s40, 1
        %s132 = scalar_lea.sflag [#allocation3], %s131
        %s133 = sand.u32 %s40, 1
        %s134 = smul.addr %s133, 128
        %s135 = scalar_lea.vmem [#allocation2], %s134
        // Predicated region
        $region25: #{tpu_custom_call.1} parent=23 // pred_check
          %p136 = pneg %p53
        $region26: #{tpu_custom_call.1} parent=23 // pred_check_branch
          %138 = sbr.rel (%p136) target = $region28
        $region27: #{tpu_custom_call.1} parent=23 // pred_region
          %140 = dma.done %s132, 2048
        $region28: #{tpu_custom_call.1} parent=23 // pred_fallthru
          _
        %s141 = sand.u32 %s40, 1
        %s142 = scalar_lea.sflag [#allocation3], %s141
        %s143 = sand.u32 %s40, 1
        %s144 = smul.addr %s143, 128
        %s145 = scalar_lea.vmem [#allocation2], %s144
        %p146 = pneg %p53
        %p147 = pneg %p50
        %p148 = pneg %p81
        %p149 = pneg %p78
        %s150 = sand.u32 %s68, 1
        %s151 = scalar_lea.sflag [#allocation4], %s150
        %s152 = sand.u32 %s68, 1
        %s153 = smul.addr %s152, 128
        %s154 = scalar_lea.vmem [#allocation5], %s153
        %s155 = smul.u32 16, %s22
        %s156 = smul.u32 16, %s23
        %v157 = vld [vmem:[%s135] sm:$0xff]
        %v158 = vld [vmem:[%s135 + $0x8] sm:$0xff]
        %v159 = vld [vmem:[%s135 + $0x10] sm:$0xff]
        %v160 = vld [vmem:[%s135 + $0x18] sm:$0xff]
        %v161 = vld [vmem:[%s135 + $0x20] sm:$0xff]
        %v162 = vld [vmem:[%s135 + $0x28] sm:$0xff]
        %v163 = vld [vmem:[%s135 + $0x30] sm:$0xff]
        %v164 = vld [vmem:[%s135 + $0x38] sm:$0xff]
        %v165 = vld [vmem:[%s135 + $0x40] sm:$0xff]
        %v166 = vld [vmem:[%s135 + $0x48] sm:$0xff]
        %v167 = vld [vmem:[%s135 + $0x50] sm:$0xff]
        %v168 = vld [vmem:[%s135 + $0x58] sm:$0xff]
        %v169 = vld [vmem:[%s135 + $0x60] sm:$0xff]
        %v170 = vld [vmem:[%s135 + $0x68] sm:$0xff]
        %v171 = vld [vmem:[%s135 + $0x70] sm:$0xff]
        %v172 = vld [vmem:[%s135 + $0x78] sm:$0xff]
        %v173 = vmax.f32 %v157, 0.0
        %v174 = vmax.f32 %v158, 0.0
        %v175 = vmax.f32 %v159, 0.0
        %v176 = vmax.f32 %v160, 0.0
        %v177 = vmax.f32 %v161, 0.0
        %v178 = vmax.f32 %v162, 0.0
        %v179 = vmax.f32 %v163, 0.0
        %v180 = vmax.f32 %v164, 0.0
        %v181 = vmax.f32 %v165, 0.0
        %v182 = vmax.f32 %v166, 0.0
        %v183 = vmax.f32 %v167, 0.0
        %v184 = vmax.f32 %v168, 0.0
        %v185 = vmax.f32 %v169, 0.0
        %v186 = vmax.f32 %v170, 0.0
        %v187 = vmax.f32 %v171, 0.0
        %v188 = vmax.f32 %v172, 0.0
        %189 = vxpose.xlu0.b32.start [1/16] %v173, 128
        %190 = vxpose.xlu0.b32.cont [2/16] %v174, 128
        %191 = vxpose.xlu0.b32.cont [3/16] %v175, 128
        %192 = vxpose.xlu0.b32.cont [4/16] %v176, 128
        %193 = vxpose.xlu0.b32.cont [5/16] %v177, 128
        %194 = vxpose.xlu0.b32.cont [6/16] %v178, 128
        %195 = vxpose.xlu0.b32.cont [7/16] %v179, 128
        %196 = vxpose.xlu0.b32.cont [8/16] %v180, 128
        %197 = vxpose.xlu0.b32.cont [9/16] %v181, 128
        %198 = vxpose.xlu0.b32.cont [10/16] %v182, 128
        %199 = vxpose.xlu0.b32.cont [11/16] %v183, 128
        %200 = vxpose.xlu0.b32.cont [12/16] %v184, 128
        %201 = vxpose.xlu0.b32.cont [13/16] %v185, 128
        %202 = vxpose.xlu0.b32.cont [14/16] %v186, 128
        %203 = vxpose.xlu0.b32.cont [15/16] %v187, 128
        %204 = vxpose.xlu0.b32.end [16/16] %v188, 128
        %v205 = vpop.trf.xlu0
        %v206 = vpop.trf.xlu0
        %v207 = vpop.trf.xlu0
        %v208 = vpop.trf.xlu0
        %v209 = vpop.trf.xlu0
        %v210 = vpop.trf.xlu0
        %v211 = vpop.trf.xlu0
        %v212 = vpop.trf.xlu0
        %v213 = vpop.trf.xlu0
        %v214 = vpop.trf.xlu0
        %v215 = vpop.trf.xlu0
        %v216 = vpop.trf.xlu0
        %v217 = vpop.trf.xlu0
        %v218 = vpop.trf.xlu0
        %v219 = vpop.trf.xlu0
        %v220 = vpop.trf.xlu0
        %221 = vst [vmem:[%s154] sm:$0xff] %v205
        %222 = vst [vmem:[%s154 + $0x8] sm:$0xff] %v206
        %223 = vst [vmem:[%s154 + $0x10] sm:$0xff] %v207
        %224 = vst [vmem:[%s154 + $0x18] sm:$0xff] %v208
        %225 = vst [vmem:[%s154 + $0x20] sm:$0xff] %v209
        %226 = vst [vmem:[%s154 + $0x28] sm:$0xff] %v210
        %227 = vst [vmem:[%s154 + $0x30] sm:$0xff] %v211
        %228 = vst [vmem:[%s154 + $0x38] sm:$0xff] %v212
        %229 = vst [vmem:[%s154 + $0x40] sm:$0xff] %v213
        %230 = vst [vmem:[%s154 + $0x48] sm:$0xff] %v214
        %231 = vst [vmem:[%s154 + $0x50] sm:$0xff] %v215
        %232 = vst [vmem:[%s154 + $0x58] sm:$0xff] %v216
        %233 = vst [vmem:[%s154 + $0x60] sm:$0xff] %v217
        %234 = vst [vmem:[%s154 + $0x68] sm:$0xff] %v218
        %235 = vst [vmem:[%s154 + $0x70] sm:$0xff] %v219
        %236 = vst [vmem:[%s154 + $0x78] sm:$0xff] %v220
        %s237 = sand.u32 %s68, 1
        %s238 = scalar_lea.sflag [#allocation4], %s237
        %s239 = sand.u32 %s68, 1
        %s240 = smul.addr %s239, 128
        %s241 = scalar_lea.vmem [#allocation5], %s240
        // Predicated region
        $region29: #{tpu_custom_call.1} parent=23 // pred_check
          %p242 = pneg %p78
        $region30: #{tpu_custom_call.1} parent=23 // pred_check_branch
          %244 = sbr.rel (%p242) target = $region32
        $region31: #{tpu_custom_call.1} parent=23 // pred_region
          %s245 = smul.u32 16, %s23
          %247 = vsyncadd %s238, 0
          %s248 = smul.addr %s245, 2
          %s249 = sadd.s32 %s22, %s248
          %s250 = smul.addr %s249, 8
          %s251 = scalar_lea.hbm %s1, %s250
          %s252 = sshll.u32 %s241, 4
          %s253 = int_to_ptr.vmem [resolvable:$true] %s252
          %s254 = sshll.u32 %s251, 4
          %s255 = int_to_ptr.hbm [resolvable:$true] %s254
          %260 = dma.vmem_to_hbm [thread:$0]  %s253, 2048, %s255, %s238, 128, 256, 8
        $region32: #{tpu_custom_call.1} parent=23 // pred_fallthru
          _
      $region24: #{tpu_custom_call.1} parent=5 // pred_fallthru
        _
      %p261 = scmp.le.s32.totalorder 2, %s13
      // Predicated region
      $region33: #{tpu_custom_call.1} parent=5 // pred_check
        %p262 = pneg %p261
      $region34: #{tpu_custom_call.1} parent=5 // pred_check_branch
        %264 = sbr.rel (%p262) target = $region36
      $region35: #{tpu_custom_call.1} parent=5 // pred_region
        %s265 = ssub.s32 %s13, 2
        // Predicated region
        $region37: #{tpu_custom_call.1} parent=35 // pred_check
          %p266 = pneg %p84
        $region38: #{tpu_custom_call.1} parent=35 // pred_check_branch
          %268 = sbr.rel (%p266) target = $region40
        $region39: #{tpu_custom_call.1} parent=35 // pred_region
          %s269 = sand.u32 %s69, 1
          %s270 = scalar_lea.sflag [#allocation4], %s269
          %s271 = sand.u32 %s69, 1
          %s272 = smul.addr %s271, 128
          %s273 = scalar_lea.vmem [#allocation5], %s272
          %275 = dma.done %s270, 2048
        $region40: #{tpu_custom_call.1} parent=35 // pred_fallthru
          _
      $region36: #{tpu_custom_call.1} parent=5 // pred_fallthru
        _
    $region6: #{tpu_custom_call.1} parent=1 // loop_footer
      %s17 = sadd.s32 1, %s13
    $region7: #{tpu_custom_call.1} parent=1 // loop_footer_branch
      %12 = sbr.rel target = $region3
    $region8: #{tpu_custom_call.1} parent=1 // loop_exit
      _
    %276 = vsyncpa [#allocation3], 1
    %s277 = scalar_lea.sflag [#allocation3], 1
    %278 = vsyncpa %s277, 1
    %279 = vsyncpa [#allocation4], 1
    %s280 = scalar_lea.sflag [#allocation4], 1
    %281 = vsyncpa %s280, 1

</llo_original>
